<compile_context>
chip_gen: v6e
topology: v6e:2x2x1
jax: 0.10.0
libtpu: 0.0.40
codegen_flags: <defaults>
</compile_context>

<pallas_src>
import functools

import jax
import jax.numpy as jnp
from jax import lax
from jax.experimental import pallas as pl
from jax.experimental.pallas import tpu as pltpu

# ----- deterministic hyper-parameters / learnable-scalar inits ---------------
AM_MARGIN = 0.2      # amsoftmax margin m
AM_SCALE = 30.0      # amsoftmax scale s
PROTO_W = 10.0       # prototypical scale (init_w)
PROTO_B = -5.0       # prototypical bias  (init_b)
MTL_WEIGHT = 0.6     # `weight` in MMP_Balance_MTL.forward

_NEG = -1e30         # finite "-inf" so masked-class * zero-one-hot stays NaN-free


def _round_up(x, m):
    return ((x + m - 1) // m) * m


def _l2n(v, axis):
    """L2 normalize with rsqrt; eps on the sum of squares (== clamp norm @1e-12)."""
    return v * lax.rsqrt(jnp.maximum(jnp.sum(v * v, axis=axis, keepdims=True), 1e-24))


def _lse_tgt(logits, onehot):
    """Per-row logsumexp, target logit and row max (2-D logits)."""
    mmax = jnp.max(logits, axis=-1, keepdims=True)
    lse = mmax + jnp.log(jnp.sum(jnp.exp(logits - mmax), axis=-1, keepdims=True))
    tgt = jnp.sum(logits * onehot, axis=-1, keepdims=True)
    return lse, tgt, mmax


# ------------------------- AmSoftmax row-tiled loop ---------------------------
def _amsoftmax_kernel(x_ref, lab_ref, w_hbm_ref, cls_ref, bias_ref,   # inputs
                      out_ref,                                         # output
                      w_vmem_ref, w_sem, acc_ref,                      # scratch
                      *, tiles_per_split, tn, n_valid):
    f32 = jnp.float32
    s = pl.program_id(0)          # split (megacore) index
    t = pl.program_id(1)          # row-tile index within the split

    @pl.when(t == 0)
    def _init():
        # Copy the pre-normalized bf16 class weights HBM -> this core's VMEM once
        # per split (per-core safe under the "parallel" leading axis).
        cp = pltpu.make_async_copy(w_hbm_ref, w_vmem_ref, w_sem)
        cp.start()
        cp.wait()
        acc_ref[0] = jnp.float32(0.0)     # CE loss sum for this split
        acc_ref[1] = jnp.float32(0.0)     # top-1 hit count for this split

    # ---- per-row-tile AmSoftmax CE -------------------------------------------
    x = x_ref[...].astype(f32)                                          # (TN, Dp)
    xn = _l2n(x, axis=-1).astype(jnp.bfloat16)
    costh = jnp.dot(xn, w_vmem_ref[...], preferred_element_type=f32)    # (TN, Cp)

    oh = (cls_ref[...] == lab_ref[...]).astype(f32)                     # (TN, Cp)
    # Margin folded into one FMA; padded-class masking via an additive bias row.
    logits = AM_SCALE * costh - (AM_SCALE * AM_MARGIN) * oh + bias_ref[...]

    lse, tgt, mmax = _lse_tgt(logits, oh)

    row = (s * tiles_per_split + t) * tn + lax.broadcasted_iota(jnp.int32, (tn, 1), 0)
    valid = (row < n_valid).astype(f32)                                 # mask pad rows

    acc_ref[0] = acc_ref[0] + jnp.sum((lse - tgt) * valid)
    # prec1: target tying the row max counts as correct, measured on the
    # margin-applied scaled logits (voxceleb_trainer convention).
    acc_ref[1] = acc_ref[1] + jnp.sum((tgt >= mmax).astype(f32) * valid)

    @pl.when(t == tiles_per_split - 1)
    def _finalize():
        sub = lax.broadcasted_iota(jnp.int32, (8, 128), 0)
        lane = lax.broadcasted_iota(jnp.int32, (8, 128), 1)
        out_ref[0] = jnp.where((sub == 0) & (lane == 0), acc_ref[0],
                               jnp.where((sub == 0) & (lane == 1), acc_ref[1], 0.0))


# ---------------- metric-learning branch (one-shot, off critical path) --------
def _metric_kernel(pos_ref, anc_ref, spk_ref, w_px_ref, out_ref, *, c_valid):
    f32 = jnp.float32
    bf16 = jnp.bfloat16
    b = pos_ref.shape[0]
    c_pad = w_px_ref.shape[1]

    pn = _l2n(pos_ref[...].astype(f32), axis=-1)                        # (B, Dp)
    an = _l2n(anc_ref[...].astype(f32), axis=-1)                        # (B, Dp)
    pn_b, an_b = pn.astype(bf16), an.astype(bf16)

    # pair-based (angular prototypical) term, target = diagonal
    pair = PROTO_W * lax.dot_general(pn_b, an_b, (((1,), (1,)), ((), ())),
                                     preferred_element_type=f32) + PROTO_B
    eye = (lax.broadcasted_iota(jnp.int32, (b, b), 0) ==
           lax.broadcasted_iota(jnp.int32, (b, b), 1)).astype(f32)
    lse_p, tgt_p, _ = _lse_tgt(pair, eye)
    loss_pair = jnp.sum(lse_p - tgt_p) / float(b)

    # proxy-based term: cosine to the (pre-normalized) class proxies
    proxy = PROTO_W * jnp.dot(pn_b, w_px_ref[...],
                              preferred_element_type=f32) + PROTO_B     # (B, Cp)
    cls = lax.broadcasted_iota(jnp.int32, (b, c_pad), 1)
    proxy = jnp.where(cls < c_valid, proxy, _NEG)
    oh_spk = (cls == spk_ref[...]).astype(f32)
    lse_x, tgt_x, _ = _lse_tgt(proxy, oh_spk)
    loss_proxy = jnp.sum(lse_x - tgt_x) / float(b)

    out_ref[0, 0] = 0.5 * loss_pair + 0.5 * loss_proxy


# --------------------------------- wrapper ------------------------------------
def mmp_balance_mtl(x, label, w_am, w_proxy, num_classes):
    """x: (B, M, D) float32 embeddings, label: (B,) int32 speaker ids."""
    B, M, D = x.shape
    C = num_classes
    assert M >= 2, "MMP_Balance needs >=2 utterances per speaker"
    N = B * M

    D_pad = _round_up(D, 128)
    C_pad = _round_up(C, 128)

    # ---- generation-aware tiling / VMEM budget --------------------------------
    try:
        vmem_cap = int(pltpu.get_tpu_info().vmem_capacity_bytes)
    except Exception:
        vmem_cap = 64 << 20                       # conservative (v7x per-TC size)
    vmem_budget = int(vmem_cap * 0.8)             # headroom for Mosaic scratch/sems

    # resident: single bf16 weight copy + (doubled) tiny cls/bias rows + slack
    resident = D_pad * C_pad * 2 + 4 * C_pad * 4 + (1 << 20)

    def _tile_bytes(tn):
        return (2 * tn * D_pad * 4        # double-buffered x blocks
                + 2 * tn * 4              # double-buffered label blocks
                + 6 * tn * C_pad * 4)     # (TN, C_pad) f32 temporaries

    TN = 8
    for cand in (512, 256, 128, 64, 32, 16, 8):
        if resident + _tile_bytes(cand) <= vmem_budget:
            TN = cand
            break
    TN = max(8, min(TN, _round_up(N, 8)))

    num_tiles = -(-N // TN)
    S = 2 if num_tiles >= 2 else 1                # split row tiles over v7x's 2 TCs
    TPS = -(-num_tiles // S)                      # tiles per split
    N_pad = S * TPS * TN

    vmem_limit = int(min(max(2 * (resident + _tile_bytes(TN)), 32 << 20), vmem_budget))

    # ----------------------------- host-side glue ------------------------------
    f32 = jnp.float32
    x = x.astype(f32)

    # Weight-only preprocessing (exact, once per call): L2-normalize along the
    # feature dim, zero-pad, pre-cast to bf16 MXU operands.
    def _norm_pad(w):
        w = w.astype(f32)
        w = w * lax.rsqrt(jnp.maximum(jnp.sum(w * w, axis=0, keepdims=True), 1e-24))
        return jnp.pad(w, ((0, D_pad - D), (0, C_pad - C))).astype(jnp.bfloat16)

    w_am_p = _norm_pad(w_am)
    w_px_p = _norm_pad(w_proxy)

    x_flat = jnp.pad(x.reshape(N, D), ((0, N_pad - N), (0, D_pad - D)))
    lab_rep = jnp.pad(jnp.repeat(label.astype(jnp.int32), M),   # repeat_interleave
                      (0, N_pad - N), constant_values=-1).reshape(N_pad, 1)

    cls_row = jnp.arange(C_pad, dtype=jnp.int32).reshape(1, C_pad)
    col_bias = jnp.where(cls_row < C, 0.0, _NEG).astype(f32)

    positive = jnp.pad(x[:, 0, :], ((0, 0), (0, D_pad - D)))
    anchor = jnp.pad(jnp.mean(x[:, 1:, :], axis=1), ((0, 0), (0, D_pad - D)))
    spk = label.astype(jnp.int32).reshape(B, 1)

    # --------------------------- AmSoftmax pallas_call -------------------------
    cost = pl.CostEstimate(
        flops=2 * N * D * C,
        transcendentals=N * C,
        bytes_accessed=N * (D + 1) * 4 + D_pad * C_pad * 2 + S * 8 * 128 * 4)

    am_kernel = functools.partial(_amsoftmax_kernel,
                                  tiles_per_split=TPS, tn=TN, n_valid=N)
    parts = pl.pallas_call(
        am_kernel,
        out_shape=jax.ShapeDtypeStruct((S, 8, 128), jnp.float32),
        grid_spec=pltpu.PrefetchScalarGridSpec(
            num_scalar_prefetch=0,
            grid=(S, TPS),
            in_specs=[
                pl.BlockSpec((TN, D_pad), lambda s, t: (s * TPS + t, 0)),  # x rows
                pl.BlockSpec((TN, 1), lambda s, t: (s * TPS + t, 0)),      # labels
                pl.BlockSpec(memory_space=pl.ANY),                 # W_am bf16 (HBM)
                pl.BlockSpec((1, C_pad), lambda s, t: (0, 0)),     # class-id row
                pl.BlockSpec((1, C_pad), lambda s, t: (0, 0)),     # pad-col bias row
            ],
            out_specs=pl.BlockSpec((1, 8, 128), lambda s, t: (s, 0, 0)),
            scratch_shapes=[
                pltpu.VMEM((D_pad, C_pad), jnp.bfloat16),   # resident W_am (1 copy)
                pltpu.SemaphoreType.DMA,                    # weight-copy semaphore
                pltpu.SMEM((2,), jnp.float32),              # [ce_sum, top1 hits]
            ],
        ),
        compiler_params=pltpu.CompilerParams(
            dimension_semantics=("parallel", "arbitrary"),
            vmem_limit_bytes=vmem_limit),
        cost_estimate=cost,
    )(x_flat, lab_rep, w_am_p, cls_row, col_bias)

    # ------------------------ metric-learning pallas_call ----------------------
    ml_kernel = functools.partial(_metric_kernel, c_valid=C)
    loss_ml = pl.pallas_call(
        ml_kernel,
        out_shape=jax.ShapeDtypeStruct((1, 1), jnp.float32),
        grid_spec=pltpu.PrefetchScalarGridSpec(
            num_scalar_prefetch=0,
            grid=(1,),
            in_specs=[
                pl.BlockSpec((B, D_pad), lambda i: (0, 0)),       # positive
                pl.BlockSpec((B, D_pad), lambda i: (0, 0)),       # anchor
                pl.BlockSpec((B, 1), lambda i: (0, 0)),           # speaker labels
                pl.BlockSpec((D_pad, C_pad), lambda i: (0, 0)),   # W_proxy (bf16)
            ],
            out_specs=pl.BlockSpec(memory_space=pltpu.MemorySpace.SMEM),
        ),
        compiler_params=pltpu.CompilerParams(
            dimension_semantics=("arbitrary",),
            vmem_limit_bytes=vmem_limit),
    )(positive, anchor, spk, w_px_p)

    # ------------------- cross-split reduce + MTL combine ----------------------
    ce_sum = jnp.sum(parts[:, 0, 0])
    hits = jnp.sum(parts[:, 0, 1])
    loss_ce = ce_sum / float(N)
    prec1 = 100.0 * hits / float(N)
    loss = (1.0 - MTL_WEIGHT) * loss_ce + MTL_WEIGHT * loss_ml[0, 0]
    return loss, prec1


if __name__ == "__main__":
    key = jax.random.PRNGKey(0)
    B, M, D, C = 4, 2, 32, 10          # speakers, utts/speaker, feat dim, classes

    kx, kl, kw1, kw2 = jax.random.split(key, 4)
    x = jax.random.normal(kx, (B, M, D), dtype=jnp.float32)
    label = jax.random.randint(kl, (B,), 0, C, dtype=jnp.int32)

    # deterministic xavier_normal-style init for the (D, C) class weights
    std = (2.0 / (D + C)) ** 0.5
    w_am = std * jax.random.normal(kw1, (D, C), dtype=jnp.float32)
    w_proxy = std * jax.random.normal(kw2, (D, C), dtype=jnp.float32)

    loss, prec1 = mmp_balance_mtl(x, label, w_am, w_proxy, C)
    jax.block_until_ready((loss, prec1))
    print("KERNEL_OK")
</pallas_src>

<mosaic_0001>
module attributes {stable_mosaic.version = 11 : i64} {
  func.func @_amsoftmax_kernel(%arg0: i32, %arg1: i32, %arg2: memref<8x128xf32, #tpu.memory_space<vmem>>, %arg3: memref<8x1xi32, #tpu.memory_space<vmem>>, %arg4: memref<128x128xbf16, #tpu.memory_space<any>>, %arg5: memref<1x128xi32, #tpu.memory_space<vmem>>, %arg6: memref<1x128xf32, #tpu.memory_space<vmem>>, %arg7: memref<1x8x128xf32, #tpu.memory_space<vmem>>, %arg8: memref<128x128xbf16, #tpu.memory_space<vmem>>, %arg9: memref<!tpu.dma_semaphore, #tpu.memory_space<semaphore_mem>>, %arg10: memref<2xf32, #tpu.memory_space<smem>>) attributes {dimension_semantics = [#tpu.dimension_semantics<parallel>, #tpu.dimension_semantics<arbitrary>], iteration_bounds = array<i64: 1, 1>, scalar_prefetch = 0 : i64, scratch_operands = 3 : i64, tpu.core_type = #tpu.core_type<tc>, window_params = [{transform_indices = @transform_0, window_bounds = array<i64: 8, 128>}, {transform_indices = @transform_1, window_bounds = array<i64: 8, 1>}, {}, {pipeline_mode = #tpu.pipeline_mode<synchronous>, transform_indices = @transform_3, window_bounds = array<i64: 1, 128>}, {pipeline_mode = #tpu.pipeline_mode<synchronous>, transform_indices = @transform_4, window_bounds = array<i64: 1, 128>}, {transform_indices = @transform_5, window_bounds = array<i64: 1, 8, 128>}]} {
    %c0_i32 = arith.constant 0 : i32
    %0 = arith.cmpi eq, %arg1, %c0_i32 : i32
    %1 = arith.extui %0 : i1 to i32
    %c0_i32_0 = arith.constant 0 : i32
    %2 = arith.cmpi ne, %1, %c0_i32_0 : i32
    scf.if %2 {
      tpu.enqueue_dma source(%arg4 : memref<128x128xbf16, #tpu.memory_space<any>>) target(%arg8 : memref<128x128xbf16, #tpu.memory_space<vmem>>) target_semaphore(%arg9 : memref<!tpu.dma_semaphore, #tpu.memory_space<semaphore_mem>>)
      tpu.wait_dma2 semaphore(%arg9 : memref<!tpu.dma_semaphore, #tpu.memory_space<semaphore_mem>>) src(%arg4 : memref<128x128xbf16, #tpu.memory_space<any>>) dst(%arg8 : memref<128x128xbf16, #tpu.memory_space<vmem>>)
      %cst_25 = arith.constant 0.000000e+00 : f32
      %c0_26 = arith.constant 0 : index
      %75 = memref.load %arg10[%c0_26] : memref<2xf32, #tpu.memory_space<smem>>
      memref.store %cst_25, %arg10[%c0_26] : memref<2xf32, #tpu.memory_space<smem>>
      %cst_27 = arith.constant 0.000000e+00 : f32
      %c1_28 = arith.constant 1 : index
      %76 = memref.load %arg10[%c1_28] : memref<2xf32, #tpu.memory_space<smem>>
      memref.store %cst_27, %arg10[%c1_28] : memref<2xf32, #tpu.memory_space<smem>>
    } else {
    }
    %c0 = arith.constant 0 : index
    %c0_1 = arith.constant 0 : index
    %3 = vector.load %arg2[%c0, %c0_1] : memref<8x128xf32, #tpu.memory_space<vmem>>, vector<8x128xf32>
    %4 = arith.mulf %3, %3 : vector<8x128xf32>
    %cst = arith.constant dense<0.000000e+00> : vector<8xf32>
    %5 = vector.multi_reduction <add>, %4, %cst [1] : vector<8x128xf32> to vector<8xf32>
    %6 = vector.shape_cast %5 : vector<8xf32> to vector<8x1xf32>
    %cst_2 = arith.constant 1.000000e-24 : f32
    %7 = vector.broadcast %cst_2 : f32 to vector<8x1xf32>
    %8 = arith.maximumf %6, %7 : vector<8x1xf32>
    %9 = math.rsqrt %8 : vector<8x1xf32>
    %10 = vector.broadcast %9 : vector<8x1xf32> to vector<8x128xf32>
    %11 = arith.mulf %3, %10 : vector<8x128xf32>
    %12 = arith.truncf %11 : vector<8x128xf32> to vector<8x128xbf16>
    %c0_3 = arith.constant 0 : index
    %c0_4 = arith.constant 0 : index
    %13 = vector.load %arg8[%c0_3, %c0_4] : memref<128x128xbf16, #tpu.memory_space<vmem>>, vector<128x128xbf16>
    %cst_5 = arith.constant dense<0.000000e+00> : vector<8x128xf32>
    %14 = tpu.matmul %12, %13, %cst_5 {dimension_numbers = #tpu.dot_dimension_numbers<[1], [0], [0], [1], [0, 0, 1, 1], [], []>} : vector<8x128xbf16>, vector<128x128xbf16>, vector<8x128xf32> -> vector<8x128xf32>
    %c0_6 = arith.constant 0 : index
    %c0_7 = arith.constant 0 : index
    %15 = vector.load %arg5[%c0_6, %c0_7] : memref<1x128xi32, #tpu.memory_space<vmem>>, vector<1x128xi32>
    %c0_8 = arith.constant 0 : index
    %c0_9 = arith.constant 0 : index
    %16 = vector.load %arg3[%c0_8, %c0_9] : memref<8x1xi32, #tpu.memory_space<vmem>>, vector<8x1xi32>
    %17 = vector.broadcast %15 : vector<1x128xi32> to vector<8x128xi32>
    %18 = vector.broadcast %16 : vector<8x1xi32> to vector<8x128xi32>
    %19 = arith.cmpi eq, %17, %18 : vector<8x128xi32>
    %20 = arith.extui %19 : vector<8x128xi1> to vector<8x128xi32>
    %21 = arith.sitofp %20 : vector<8x128xi32> to vector<8x128xf32>
    %cst_10 = arith.constant 3.000000e+01 : f32
    %22 = vector.broadcast %cst_10 : f32 to vector<8x128xf32>
    %23 = arith.mulf %22, %14 : vector<8x128xf32>
    %cst_11 = arith.constant 6.000000e+00 : f32
    %24 = vector.broadcast %cst_11 : f32 to vector<8x128xf32>
    %25 = arith.mulf %24, %21 : vector<8x128xf32>
    %26 = arith.subf %23, %25 : vector<8x128xf32>
    %c0_12 = arith.constant 0 : index
    %c0_13 = arith.constant 0 : index
    %27 = vector.load %arg6[%c0_12, %c0_13] : memref<1x128xf32, #tpu.memory_space<vmem>>, vector<1x128xf32>
    %28 = vector.broadcast %27 : vector<1x128xf32> to vector<8x128xf32>
    %29 = arith.addf %26, %28 : vector<8x128xf32>
    %cst_14 = arith.constant dense<0xFF800000> : vector<8xf32>
    %30 = vector.multi_reduction <maximumf>, %29, %cst_14 [1] : vector<8x128xf32> to vector<8xf32>
    %31 = vector.shape_cast %30 : vector<8xf32> to vector<8x1xf32>
    %32 = vector.broadcast %31 : vector<8x1xf32> to vector<8x128xf32>
    %33 = arith.subf %29, %32 : vector<8x128xf32>
    %34 = math.exp %33 : vector<8x128xf32>
    %cst_15 = arith.constant dense<0.000000e+00> : vector<8xf32>
    %35 = vector.multi_reduction <add>, %34, %cst_15 [1] : vector<8x128xf32> to vector<8xf32>
    %36 = vector.shape_cast %35 : vector<8xf32> to vector<8x1xf32>
    %37 = math.log %36 : vector<8x1xf32>
    %38 = arith.addf %31, %37 : vector<8x1xf32>
    %39 = arith.mulf %29, %21 : vector<8x128xf32>
    %cst_16 = arith.constant dense<0.000000e+00> : vector<8xf32>
    %40 = vector.multi_reduction <add>, %39, %cst_16 [1] : vector<8x128xf32> to vector<8xf32>
    %41 = vector.shape_cast %40 : vector<8xf32> to vector<8x1xf32>
    %c1_i32 = arith.constant 1 : i32
    %42 = arith.muli %arg0, %c1_i32 : i32
    %43 = arith.addi %42, %arg1 : i32
    %c8_i32 = arith.constant 8 : i32
    %44 = arith.muli %43, %c8_i32 : i32
    %45 = tpu.iota {dimensions = array<i32: 0>} : vector<8x1xi32>
    %46 = vector.broadcast %44 : i32 to vector<8x1xi32>
    %47 = arith.addi %46, %45 : vector<8x1xi32>
    %c8_i32_17 = arith.constant 8 : i32
    %48 = vector.broadcast %c8_i32_17 : i32 to vector<8x1xi32>
    %49 = arith.cmpi slt, %47, %48 : vector<8x1xi32>
    %50 = arith.extui %49 : vector<8x1xi1> to vector<8x1xi32>
    %51 = arith.sitofp %50 : vector<8x1xi32> to vector<8x1xf32>
    %c0_18 = arith.constant 0 : index
    %52 = memref.load %arg10[%c0_18] : memref<2xf32, #tpu.memory_space<smem>>
    %53 = arith.subf %38, %41 : vector<8x1xf32>
    %54 = arith.mulf %53, %51 : vector<8x1xf32>
    %55 = vector.shape_cast %54 : vector<8x1xf32> to vector<1x8x1xf32>
    %cst_19 = arith.constant dense<0.000000e+00> : vector<1xf32>
    %56 = vector.multi_reduction <add>, %55, %cst_19 [1, 2] : vector<1x8x1xf32> to vector<1xf32>
    %57 = vector.shape_cast %56 : vector<1xf32> to vector<1x1x1xf32>
    %58 = vector.extract %57[0, 0, 0] : f32 from vector<1x1x1xf32>
    %59 = arith.addf %52, %58 : f32
    %c0_20 = arith.constant 0 : index
    %60 = memref.load %arg10[%c0_20] : memref<2xf32, #tpu.memory_space<smem>>
    memref.store %59, %arg10[%c0_20] : memref<2xf32, #tpu.memory_space<smem>>
    %c1 = arith.constant 1 : index
    %61 = memref.load %arg10[%c1] : memref<2xf32, #tpu.memory_space<smem>>
    %62 = arith.cmpf oge, %41, %31 : vector<8x1xf32>
    %63 = arith.extui %62 : vector<8x1xi1> to vector<8x1xi32>
    %64 = arith.sitofp %63 : vector<8x1xi32> to vector<8x1xf32>
    %65 = arith.mulf %64, %51 : vector<8x1xf32>
    %66 = vector.shape_cast %65 : vector<8x1xf32> to vector<1x8x1xf32>
    %cst_21 = arith.constant dense<0.000000e+00> : vector<1xf32>
    %67 = vector.multi_reduction <add>, %66, %cst_21 [1, 2] : vector<1x8x1xf32> to vector<1xf32>
    %68 = vector.shape_cast %67 : vector<1xf32> to vector<1x1x1xf32>
    %69 = vector.extract %68[0, 0, 0] : f32 from vector<1x1x1xf32>
    %70 = arith.addf %61, %69 : f32
    %c1_22 = arith.constant 1 : index
    %71 = memref.load %arg10[%c1_22] : memref<2xf32, #tpu.memory_space<smem>>
    memref.store %70, %arg10[%c1_22] : memref<2xf32, #tpu.memory_space<smem>>
    %c0_i32_23 = arith.constant 0 : i32
    %72 = arith.cmpi eq, %arg1, %c0_i32_23 : i32
    %73 = arith.extui %72 : i1 to i32
    %c0_i32_24 = arith.constant 0 : i32
    %74 = arith.cmpi ne, %73, %c0_i32_24 : i32
    scf.if %74 {
      %75 = tpu.iota {dimensions = array<i32: 0>} : vector<8x128xi32>
      %76 = tpu.iota {dimensions = array<i32: 1>} : vector<8x128xi32>
      %c0_i32_25 = arith.constant 0 : i32
      %77 = vector.broadcast %c0_i32_25 : i32 to vector<8x128xi32>
      %78 = arith.cmpi eq, %75, %77 : vector<8x128xi32>
      %c0_i32_26 = arith.constant 0 : i32
      %79 = vector.broadcast %c0_i32_26 : i32 to vector<8x128xi32>
      %80 = arith.cmpi eq, %76, %79 : vector<8x128xi32>
      %81 = arith.andi %78, %80 : vector<8x128xi1>
      %c0_27 = arith.constant 0 : index
      %82 = memref.load %arg10[%c0_27] : memref<2xf32, #tpu.memory_space<smem>>
      %c0_i32_28 = arith.constant 0 : i32
      %83 = vector.broadcast %c0_i32_28 : i32 to vector<8x128xi32>
      %84 = arith.cmpi eq, %75, %83 : vector<8x128xi32>
      %c1_i32_29 = arith.constant 1 : i32
      %85 = vector.broadcast %c1_i32_29 : i32 to vector<8x128xi32>
      %86 = arith.cmpi eq, %76, %85 : vector<8x128xi32>
      %87 = arith.andi %84, %86 : vector<8x128xi1>
      %c1_30 = arith.constant 1 : index
      %88 = memref.load %arg10[%c1_30] : memref<2xf32, #tpu.memory_space<smem>>
      %cst_31 = arith.constant 0.000000e+00 : f32
      %89 = vector.broadcast %88 : f32 to vector<8x128xf32>
      %90 = vector.broadcast %cst_31 : f32 to vector<8x128xf32>
      %91 = arith.select %87, %89, %90 : vector<8x128xi1>, vector<8x128xf32>
      %92 = vector.broadcast %82 : f32 to vector<8x128xf32>
      %93 = arith.select %81, %92, %91 : vector<8x128xi1>, vector<8x128xf32>
      %c0_32 = arith.constant 0 : index
      %c0_33 = arith.constant 0 : index
      %c0_34 = arith.constant 0 : index
      %94 = vector.load %arg7[%c0_32, %c0_33, %c0_34] : memref<1x8x128xf32, #tpu.memory_space<vmem>>, vector<1x8x128xf32>
      %95 = vector.shape_cast %94 : vector<1x8x128xf32> to vector<8x128xf32>
      %96 = vector.shape_cast %93 : vector<8x128xf32> to vector<1x8x128xf32>
      tpu.vector_store %arg7[%c0_32, %c0_33, %c0_34], %96 {strides = array<i32>} : memref<1x8x128xf32, #tpu.memory_space<vmem>>, vector<1x8x128xf32>,
    } else {
    }
    return
  }
  func.func @transform_0(%arg0: i32, %arg1: i32) -> (i32, i32) {
    %c1_i32 = arith.constant 1 : i32
    %0 = arith.muli %arg0, %c1_i32 : i32
    %1 = arith.addi %0, %arg1 : i32
    %c0_i32 = arith.constant 0 : i32
    %c0_i32_0 = arith.constant 0 : i32
    return %1, %c0_i32 : i32, i32
  }
  func.func @transform_1(%arg0: i32, %arg1: i32) -> (i32, i32) {
    %c1_i32 = arith.constant 1 : i32
    %0 = arith.muli %arg0, %c1_i32 : i32
    %1 = arith.addi %0, %arg1 : i32
    %c0_i32 = arith.constant 0 : i32
    %c0_i32_0 = arith.constant 0 : i32
    return %1, %c0_i32 : i32, i32
  }
  func.func @transform_3(%arg0: i32, %arg1: i32) -> (i32, i32) {
    %c0_i32 = arith.constant 0 : i32
    %c0_i32_0 = arith.constant 0 : i32
    %c0_i32_1 = arith.constant 0 : i32
    return %c0_i32, %c0_i32_0 : i32, i32
  }
  func.func @transform_4(%arg0: i32, %arg1: i32) -> (i32, i32) {
    %c0_i32 = arith.constant 0 : i32
    %c0_i32_0 = arith.constant 0 : i32
    %c0_i32_1 = arith.constant 0 : i32
    return %c0_i32, %c0_i32_0 : i32, i32
  }
  func.func @transform_5(%arg0: i32, %arg1: i32) -> (i32, i32, i32) {
    %c0_i32 = arith.constant 0 : i32
    %c0_i32_0 = arith.constant 0 : i32
    %c0_i32_1 = arith.constant 0 : i32
    return %arg0, %c0_i32, %c0_i32_0 : i32, i32, i32
  }
}

</mosaic_0001>

<llo_original>
// kernel: tpu_custom_call.1
$region0: #{tpu_custom_call.1}
  #allocation0 [shape = 'u32[]', space=smem, size = 0x4, offset = 0x4, fixed_abs, tag = 'smem constant byte address 0x4 - core index']
  #allocation1 [shape = 'u32[144,128]{1,0:T(1,128)}', space=vmem, size = 0x12000, scoped, tag = 'internal scratch']
  #allocation2 [shape = 'bf16[128,128]{1,0:T(8,128)(2,1)}', space=vmem, size = 0x8000, scoped, tag = 'scratch operand']
  #allocation3 [shape = 's32[1]{0}', space=sflag, size = 0x4, scoped, tag = 'scratch operand']
  #allocation4 [shape = 'f32[2]{0:T(128)}', space=smem, size = 0x200, scoped, tag = 'scratch operand']
  #allocation7 [shape = 's32[]', space=sflag, size = 0x4, offset = 0, fixed_abs, tag = 'sflag constant byte address 0x0 - dummy sync flag']
  #allocation8 [shape = 's32[]', space=sflag, size = 0x4, offset = 0, fixed_abs, tag = 'sflag constant byte address 0x0 - dummy sync flag']
  #allocation9 [shape = 'u32[]', space=smem, size = 0x4, offset = 0x44, fixed_abs, tag = 'smem constant byte address 0x44 - assertion arg 0']
  #allocation10 [shape = 'u32[]', space=smem, size = 0x4, offset = 0x48, fixed_abs, tag = 'smem constant byte address 0x48 - assertion arg 1']
  %s0 = inlined_call_operand.vmem [shape: f32[8,128], index: 0, kind: input, shape index: {}]
  %s1 = inlined_call_operand.vmem [shape: s32[8,1], index: 1, kind: input, shape index: {}]
  %s2 = inlined_call_operand.hbm [shape: bf16[128,128], index: 2, kind: input, shape index: {}]
  %s3 = inlined_call_operand.vmem [shape: s32[1,128], index: 3, kind: input, shape index: {}]
  %s4 = inlined_call_operand.vmem [shape: f32[1,128], index: 4, kind: input, shape index: {}]
  %s5 = inlined_call_operand.hbm [shape: f32[1,8,128], index: 5, kind: output, shape index: {}]
  %s6 = sld [smem:[#allocation0]]
  $region38: #{tpu_custom_call.1} parent=0
    _
  %s8 = ssub.s32 1, %s6
  %s9 = scalar_select 0, %s8, %s6
  $region1: #{tpu_custom_call.1} parent=0
    #allocation5 [shape = 'u8[4096]{0}', space=vmem, size = 0x1000, scoped, tag = 'output window, operand 0, single buffered']
    #allocation6 [shape = 's32[1]{0}', space=sflag, size = 0x4, scoped, tag = 'scoped memory for tpu_custom_call.1']
    %10 = vsyncpa [#allocation6], 0
    // Predicated region
    $region2: #{tpu_custom_call.1} parent=1 // pred_check
      _
    $region3: #{tpu_custom_call.1} parent=1 // pred_check_branch
      %12 = sbr.rel (0) target = $region5
    $region4: #{tpu_custom_call.1} parent=1 // pred_region
      %s13 = sadd.s32 0, 0
      %p14 = scmp.lt.s32.totalorder %s13, 0
      %s15 = scalar_select %p14, %s13, 0
      %s16 = smul.addr %s15, 8
      %s17 = scalar_lea.vmem %s0, %s16
      %s18 = sadd.s32 0, 0
    $region5: #{tpu_custom_call.1} parent=1 // pred_fallthru
      _
    // Predicated region
    $region6: #{tpu_custom_call.1} parent=1 // pred_check
      _
    $region7: #{tpu_custom_call.1} parent=1 // pred_check_branch
      %20 = sbr.rel (0) target = $region9
    $region8: #{tpu_custom_call.1} parent=1 // pred_region
      %s21 = sadd.s32 0, 0
      %p22 = scmp.lt.s32.totalorder %s21, 0
      %s23 = scalar_select %p22, %s21, 0
      %s24 = smul.addr %s23, 8
      %s25 = scalar_lea.vmem %s1, %s24
      %s26 = sadd.s32 0, 0
    $region9: #{tpu_custom_call.1} parent=1 // pred_fallthru
      _
    // Predicated region
    $region10: #{tpu_custom_call.1} parent=1 // pred_check
      _
    $region11: #{tpu_custom_call.1} parent=1 // pred_check_branch
      %28 = sbr.rel (0) target = $region13
    $region12: #{tpu_custom_call.1} parent=1 // pred_region
      _
    $region13: #{tpu_custom_call.1} parent=1 // pred_fallthru
      _
    // Predicated region
    $region14: #{tpu_custom_call.1} parent=1 // pred_check
      _
    $region15: #{tpu_custom_call.1} parent=1 // pred_check_branch
      %30 = sbr.rel (0) target = $region17
    $region16: #{tpu_custom_call.1} parent=1 // pred_region
      _
    $region17: #{tpu_custom_call.1} parent=1 // pred_fallthru
      _
    %s31 = sadd.s32 0, 0
    %p32 = scmp.lt.s32.totalorder %s31, 0
    %s33 = scalar_select %p32, %s31, 0
    %s34 = smul.addr %s33, 8
    %s35 = scalar_lea.vmem %s0, %s34
    %s36 = sadd.s32 0, 0
    %p37 = scmp.lt.s32.totalorder %s36, 0
    %s38 = scalar_select %p37, %s36, 0
    %s39 = smul.addr %s38, 8
    %s40 = scalar_lea.vmem %s1, %s39
    %s41 = sadd.s32 0, 0
    %p42 = scmp.lt.s32.totalorder %s41, 0
    %s43 = scalar_select %p42, %s41, 0
    %s44 = smul.addr %s43, 8
    %s45 = scalar_lea.vmem %s0, %s44
    %s46 = sadd.s32 0, 0
    %s47 = sadd.s32 0, 0
    %p48 = scmp.lt.s32.totalorder %s47, 0
    %s49 = scalar_select %p48, %s47, 0
    %s50 = smul.addr %s49, 8
    %s51 = scalar_lea.vmem %s1, %s50
    %s52 = sadd.s32 0, 0
    %p54 = scmp.eq.s32.totalorder 0, 0
    // Predicated region
    $region18: #{tpu_custom_call.1} parent=1 // pred_check
      %p55 = pneg %p54
    $region19: #{tpu_custom_call.1} parent=1 // pred_check_branch
      %57 = sbr.rel (%p55) target = $region21
    $region20: #{tpu_custom_call.1} parent=1 // pred_region
      // Predicated region
      $region22: #{tpu_custom_call.1} parent=20 // pred_check
        _
      $region23: #{tpu_custom_call.1} parent=20 // pred_check_branch
        %59 = sbr.rel target = $region25
      $region24: #{tpu_custom_call.1} parent=20 // pred_region
        %60 = sst [smem:[#allocation9]] [#allocation8]
        %61 = sst [smem:[#allocation10]] [#allocation7]
      $region25: #{tpu_custom_call.1} parent=20 // pred_fallthru
        _
      %63 = shalt.err (0)
      %s65 = sshll.u32 [#allocation2], 4
      %s66 = int_to_ptr.vmem [resolvable:$true] %s65
      %68 = dma.hbm_to_vmem [thread:$0]  %s2, 1024, %s66, [#allocation3]
      %s69 = smul.u32 4, 16
      %s70 = smul.u32 %s69, 1
      %s71 = sshll.u32 %s70, 4
      %72 = dma.done [#allocation3], %s71
      %s73 = scalar_lea.smem [#allocation4], 0
      %74 = sst [smem:[%s73]] 0.0
      %s75 = scalar_lea.smem [#allocation4], 1
      %76 = sst [smem:[%s75]] 0.0
    $region21: #{tpu_custom_call.1} parent=1 // pred_fallthru
      _
    %v77 = vld [vmem:[%s45] sm:$0xff]
    %v78 = vmul.f32 %v77, %v77
    %79 = vadd.xlane.f32.xlu0 %v78
    %v80 = vpop.xlane.xlu0 %79
    %v81 = vmax.f32 %v80, 1e-24
    %v82 = vrsqrt.pop %v81
    %v83 = vmul.f32 %v77, %v82
    %v84 = vpack.c.bf16 %v83, %v83
    %v85 = vld [vmem:[#allocation2] sm:$0xf]
    %v86 = vld [vmem:[#allocation2 + $0x4] sm:$0xf]
    %v87 = vld [vmem:[#allocation2 + $0x8] sm:$0xf]
    %v88 = vld [vmem:[#allocation2 + $0xc] sm:$0xf]
    %v89 = vld [vmem:[#allocation2 + $0x10] sm:$0xf]
    %v90 = vld [vmem:[#allocation2 + $0x14] sm:$0xf]
    %v91 = vld [vmem:[#allocation2 + $0x18] sm:$0xf]
    %v92 = vld [vmem:[#allocation2 + $0x1c] sm:$0xf]
    %v93 = vld [vmem:[#allocation2 + $0x20] sm:$0xf]
    %v94 = vld [vmem:[#allocation2 + $0x24] sm:$0xf]
    %v95 = vld [vmem:[#allocation2 + $0x28] sm:$0xf]
    %v96 = vld [vmem:[#allocation2 + $0x2c] sm:$0xf]
    %v97 = vld [vmem:[#allocation2 + $0x30] sm:$0xf]
    %v98 = vld [vmem:[#allocation2 + $0x34] sm:$0xf]
    %v99 = vld [vmem:[#allocation2 + $0x38] sm:$0xf]
    %v100 = vld [vmem:[#allocation2 + $0x3c] sm:$0xf]
    %v117 = vunpack.c.l.b16 %v85
    %v118 = vunpack.c.l.b16 %v86
    %v119 = vunpack.c.l.b16 %v87
    %v120 = vunpack.c.l.b16 %v88
    %v121 = vunpack.c.l.b16 %v89
    %v122 = vunpack.c.l.b16 %v90
    %v123 = vunpack.c.l.b16 %v91
    %v124 = vunpack.c.l.b16 %v92
    %v125 = vunpack.c.l.b16 %v93
    %v126 = vunpack.c.l.b16 %v94
    %v127 = vunpack.c.l.b16 %v95
    %v128 = vunpack.c.l.b16 %v96
    %v129 = vunpack.c.l.b16 %v97
    %v130 = vunpack.c.l.b16 %v98
    %v131 = vunpack.c.l.b16 %v99
    %v132 = vunpack.c.l.b16 %v100
    %v133 = vpack.c.b16 %v118, %v117
    %v134 = vpack.c.b16 %v120, %v119
    %v135 = vpack.c.b16 %v122, %v121
    %v136 = vpack.c.b16 %v124, %v123
    %v137 = vpack.c.b16 %v126, %v125
    %v138 = vpack.c.b16 %v128, %v127
    %v139 = vpack.c.b16 %v130, %v129
    %v140 = vpack.c.b16 %v132, %v131
    %149 = vmatprep.subr.bf16.mxu0 0
    %150 = vmatpush1.bf16.msra.mxu0 %v140
    %151 = vmatprep.subr.bf16.mxu0 0
    %152 = vmatpush1.bf16.msra.mxu0 %v139
    %153 = vmatprep.subr.bf16.mxu0 0
    %154 = vmatpush1.bf16.msra.mxu0 %v138
    %155 = vmatprep.subr.bf16.mxu0 0
    %156 = vmatpush1.bf16.msra.mxu0 %v137
    %157 = vmatprep.subr.bf16.mxu0 0
    %158 = vmatpush1.bf16.msra.mxu0 %v136
    %159 = vmatprep.subr.bf16.mxu0 0
    %160 = vmatpush1.bf16.msra.mxu0 %v135
    %161 = vmatprep.subr.bf16.mxu0 0
    %162 = vmatpush1.bf16.msra.mxu0 %v134
    %163 = vmatprep.subr.bf16.mxu0 0
    %164 = vmatpush1.bf16.msra.mxu0 %v133
    %165 = vmatprep.subr.bf16.mxu0 0
    %166 = vmatpush2.bf16.msra.mxu0 0
    %167 = vmatprep.subr.bf16.mxu0 0
    %168 = vmatpush2.bf16.msra.mxu0 0
    %169 = vmatprep.subr.bf16.mxu0 0
    %170 = vmatpush2.bf16.msra.mxu0 0
    %171 = vmatprep.subr.bf16.mxu0 0
    %172 = vmatpush2.bf16.msra.mxu0 0
    %173 = vmatprep.subr.bf16.mxu0 0
    %174 = vmatpush2.bf16.msra.mxu0 0
    %175 = vmatprep.subr.bf16.mxu0 0
    %176 = vmatpush2.bf16.msra.mxu0 0
    %177 = vmatprep.subr.bf16.mxu0 0
    %178 = vmatpush2.bf16.msra.mxu0 0
    %179 = vmatprep.subr.bf16.mxu0 0
    %180 = vmatpush2.bf16.msra.mxu0 0
    %181 = vmatprep.mubr.bf16.mxu0 0
    %182 = vmatmul.mubr.bf16.gmra.mxu0 %v84
    %v183 = vpop.f32.mrf.mxu0
    %v184 = vadd.f32 0.0, %v183
    %v185 = vpop.f32.mrf.mxu0
    %v186 = vpop.f32.mrf.mxu0
    %v187 = vpop.f32.mrf.mxu0
    %188 = vdwg.mxu0
    %v189 = vld [vmem:[%s3] sm:$0x1]
    %v190 = vld [vmem:[%s51] sm:$0xff]
    %v191 = vlaneseq
    %v192 = vshrl.u32 %v191, 7
    %v193 = vsub.s32 0, %v192
    %v194 = vrot.slane %v189, %v193
    %195 = vset.pattern.permute.xlu0 0
    %196 = vperm.xlu0 %195, %v190
    %v197 = vpop.permute.xlu0 %196
    %vm198 = vcmp.eq.s32.totalorder %v194, %v197
    %v199 = vsel %vm198, 1, 0
    %v200 = vcvt.s32.f32 %v199
    %v201 = vmul.f32 %v184, 30.0
    %v202 = vmul.f32 %v200, 6.0
    %v203 = vsub.f32 %v201, %v202
    %v204 = vld [vmem:[%s4] sm:$0x1]
    %v206 = vlaneseq
    %v207 = vshrl.u32 %v206, 7
    %v208 = vsub.s32 0, %v207
    %v209 = vrot.slane %v204, %v208
    %v211 = vadd.f32 %v203, %v209
    %212 = vmax.xlane.f32.xlu0 %v211
    %v213 = vpop.xlane.xlu0 %212
    %v214 = vsub.f32 %v211, %v213
    %v215 = vmul.f32 %v214, 1.442695
    %v216 = vpow.pop %v215
    %217 = vadd.xlane.f32.xlu0 %v216
    %v218 = vpop.xlane.xlu0 %217
    %v219 = vlog2.pop %v218
    %v220 = vmul.f32 %v219, 0.6931472
    %v221 = vadd.f32 %v213, %v220
    %v222 = vmul.f32 %v211, %v200
    %223 = vadd.xlane.f32.xlu0 %v222
    %v224 = vpop.xlane.xlu0 %223
    %s225 = sadd.s32 0, 0
    %s226 = smul.u32 %s225, 8
    %v227 = vlaneseq
    %v228 = vshrl.u32 %v227, 7
    %v229 = vstv %s226
    %v230 = vadd.s32 %v229, %v228
    %vm231 = vcmp.lt.s32.totalorder %v230, 8
    %v232 = vsel %vm231, 1, 0
    %v233 = vcvt.s32.f32 %v232
    %s234 = sld [smem:[#allocation4]]
    %v235 = vsub.f32 %v221, %v224
    %v236 = vmul.f32 %v235, %v233
    %vm237 = vcmask 7168
    %v238 = vsel %vm237, %v236, 0.0
    %239 = vadd.xlane.f32.xlu0 %v238
    %v240 = vpop.xlane.xlu0 %239
    %v241 = vrot.slane %v240, 4
    %v242 = vadd.f32 %v240, %v241
    %v243 = vrot.slane %v242, 2
    %v244 = vadd.f32 %v242, %v243
    %v245 = vrot.slane %v244, 1
    %v246 = vadd.f32 %v244, %v245
    %s247 = vtos %v246
    %s248 = sadd.f32 %s234, %s247
    %s249 = scalar_lea.smem [#allocation4], 0
    %250 = sst [smem:[%s249]] %s248
    %s251 = sld [smem:[#allocation4 + $0x1]]
    %vm252 = vcmp.ge.f32.partialorder %v224, %v213
    %v253 = vsel %vm252, 1, 0
    %v254 = vcvt.s32.f32 %v253
    %v255 = vmul.f32 %v254, %v233
    %v256 = vsel %vm237, %v255, 0.0
    %257 = vadd.xlane.f32.xlu0 %v256
    %v258 = vpop.xlane.xlu0 %257
    %v259 = vrot.slane %v258, 4
    %v260 = vadd.f32 %v258, %v259
    %v261 = vrot.slane %v260, 2
    %v262 = vadd.f32 %v260, %v261
    %v263 = vrot.slane %v262, 1
    %v264 = vadd.f32 %v262, %v263
    %s265 = vtos %v264
    %s266 = sadd.f32 %s251, %s265
    %s267 = scalar_lea.smem [#allocation4], 1
    %268 = sst [smem:[%s267]] %s266
    // Predicated region
    $region26: #{tpu_custom_call.1} parent=1 // pred_check
      %p269 = pneg %p54
    $region27: #{tpu_custom_call.1} parent=1 // pred_check_branch
      %271 = sbr.rel (%p269) target = $region29
    $region28: #{tpu_custom_call.1} parent=1 // pred_region
      %v272 = vlaneseq
      %v273 = vand.u32 %v272, 127
      %vm274 = vcmp.eq.s32.totalorder %v228, 0
      %vm275 = vcmp.eq.s32.totalorder %v273, 0
      %vm276 = vmand %vm274, %vm275
      %s277 = sld [smem:[#allocation4]]
      %vm278 = vcmp.eq.s32.totalorder %v273, 1
      %vm279 = vmand %vm274, %vm278
      %s280 = sld [smem:[#allocation4 + $0x1]]
      %v281 = vstv %s280
      %v282 = vsel %vm279, %v281, 0.0
      %v283 = vstv %s277
      %v284 = vsel %vm276, %v283, %v282
      %285 = vst [vmem:[#allocation5] sm:$0xff] %v284
    $region29: #{tpu_custom_call.1} parent=1 // pred_fallthru
      _
    // Predicated region
    $region30: #{tpu_custom_call.1} parent=1 // pred_check
      _
    $region31: #{tpu_custom_call.1} parent=1 // pred_check_branch
      %287 = sbr.rel (0) target = $region33
    $region32: #{tpu_custom_call.1} parent=1 // pred_region
      %s289 = ssub.s32 128, 128
      %290 = vsyncadd [#allocation6], %s289
      %s292 = sshll.u32 [#allocation5], 4
      %s293 = int_to_ptr.vmem [resolvable:$true] %s292
      %295 = dma.vmem_to_hbm [thread:$0]  %s293, 128, %s5, [#allocation6]
    $region33: #{tpu_custom_call.1} parent=1 // pred_fallthru
      _
    // Predicated region
    $region34: #{tpu_custom_call.1} parent=1 // pred_check
      _
    $region35: #{tpu_custom_call.1} parent=1 // pred_check_branch
      %297 = sbr.rel (0) target = $region37
    $region36: #{tpu_custom_call.1} parent=1 // pred_region
      %298 = dma.done [#allocation6], 128
    $region37: #{tpu_custom_call.1} parent=1 // pred_fallthru
      _
    %299 = vsyncpa [#allocation6], 1
  %300 = vsyncmov [#allocation3]
  %s301 = vpop.sfrf %300
  %p302 = scmp.eq.s32.totalorder %s301, 0
  %p303 = pneg %p302
  %305 = shalt.err (%p303)

</llo_original>
